<compile_context>
chip_gen: v5e
topology: v5e:2x2
jax: 0.10.0
libtpu: 0.0.40
codegen_flags: <defaults>
</compile_context>

<pallas_src>
import math

import jax
import jax.numpy as jnp
from jax.experimental import pallas as pl
from jax.experimental.pallas import tpu as pltpu


def _round_up(x, m):
    return ((x + m - 1) // m) * m


def _value_mlp_kernel(xT_ref, w1T_ref, b1_ref, w2T_ref, b2_ref, w3_ref, b3_ref, o_ref):
    # xT:  (D, TB)  bf16   state tile, batch on lanes
    # w1T: (H, D)   bf16   b1: (H, 1) f32
    # w2T: (H, H)   bf16   b2: (H, 1) f32
    # w3:  (1, H)   bf16   b3: (1, 1) f32
    # o:   (1, TB)  f32    lane-dense output row
    h = jnp.dot(w1T_ref[...], xT_ref[...], preferred_element_type=jnp.float32)
    h = jnp.maximum(h + b1_ref[...], 0.0)
    h = jnp.dot(w2T_ref[...], h.astype(jnp.bfloat16),
                preferred_element_type=jnp.float32)
    h = jnp.maximum(h + b2_ref[...], 0.0)
    v = jnp.dot(w3_ref[...], h.astype(jnp.bfloat16),
                preferred_element_type=jnp.float32)
    o_ref[...] = v + b3_ref[...]


def value_function_forward(state, params, *, block_batch=2048):
    """state: (B, state_dim) float32 -> (B,) float32 value estimates."""
    B, D = state.shape
    H = params["w1"].shape[1]

    # Tile size along the (lane) batch axis: multiple of 128, capped by the
    # requested block_batch and by the lane-padded batch.
    b_lanes = _round_up(B, 128)
    tb = min(_round_up(max(block_batch, 128), 128), b_lanes)
    # v7x megacore: if the batch supports >= 2 lane-tiles, make sure the grid
    # has at least 2 steps so both TensorCores get work.
    if b_lanes >= 2 * 128 and b_lanes // tb < 2:
        tb = _round_up(pl.cdiv(b_lanes, 2), 128)
    n_tiles = pl.cdiv(B, tb)
    b_pad = n_tiles * tb

    # Transposed, padded, bf16 input: (D, b_pad).
    xT = state.astype(jnp.float32).T
    if b_pad != B:
        xT = jnp.pad(xT, ((0, 0), (0, b_pad - B)))
    xT = xT.astype(jnp.bfloat16)

    w1T = params["w1"].T.astype(jnp.bfloat16)               # (H, D)
    b1 = params["b1"].reshape(H, 1).astype(jnp.float32)     # (H, 1)
    w2T = params["w2"].T.astype(jnp.bfloat16)               # (H, H)
    b2 = params["b2"].reshape(H, 1).astype(jnp.float32)     # (H, 1)
    w3 = params["w3"].reshape(1, H).astype(jnp.bfloat16)    # (1, H)
    b3 = params["b3"].reshape(1, 1).astype(jnp.float32)     # (1, 1)

    # Scoped-VMEM budget: double-buffered x/out tiles + resident weights +
    # f32 intermediates, with generous headroom.
    vmem_bytes = (
        2 * _round_up(D, 32) * tb * 2      # xT double-buffer (bf16)
        + 2 * 8 * tb * 4                   # out double-buffer (f32, 1->8 sublanes)
        + 2 * H * 128 * 2                  # W1^T (lane-padded 17->128), bf16
        + 2 * H * H * 2                    # W2^T, bf16
        + 4 * H * 128 * 4                  # b1/b2 columns, w3 row, b3 (padded)
        + 3 * H * tb * 4                   # h / h2 / matmul results in f32
    )
    vmem_limit = min(int(vmem_bytes * 1.5) + (4 << 20), 100 << 20)

    out = pl.pallas_call(
        _value_mlp_kernel,
        out_shape=jax.ShapeDtypeStruct((1, b_pad), jnp.float32),
        grid_spec=pltpu.PrefetchScalarGridSpec(
            num_scalar_prefetch=0,
            grid=(n_tiles,),
            in_specs=[
                pl.BlockSpec((D, tb), lambda i: (0, i)),   # state tile (pipelined)
                pl.BlockSpec((H, D), lambda i: (0, 0)),    # W1^T (resident)
                pl.BlockSpec((H, 1), lambda i: (0, 0)),    # b1 col (resident)
                pl.BlockSpec((H, H), lambda i: (0, 0)),    # W2^T (resident)
                pl.BlockSpec((H, 1), lambda i: (0, 0)),    # b2 col (resident)
                pl.BlockSpec((1, H), lambda i: (0, 0)),    # w3 row (resident)
                pl.BlockSpec((1, 1), lambda i: (0, 0)),    # b3 (resident)
            ],
            out_specs=pl.BlockSpec((1, tb), lambda i: (0, i)),  # lane-dense row
        ),
        compiler_params=pltpu.CompilerParams(
            dimension_semantics=("parallel",),
            vmem_limit_bytes=vmem_limit,
        ),
    )(xT, w1T, b1, w2T, b2, w3, b3)

    return out[0, :B]


def value_function_ref(state, params):
    """f32 reference with bf16-quantized matmul operands (mirrors the kernel's
    MXU dtype; accumulation is f32 in both)."""
    bf = lambda a: a.astype(jnp.bfloat16).astype(jnp.float32)
    h = jnp.maximum(bf(state) @ bf(params["w1"]) + params["b1"], 0.0)
    h = jnp.maximum(bf(h) @ bf(params["w2"]) + params["b2"], 0.0)
    return (bf(h) @ bf(params["w3"]) + params["b3"])[:, 0]


def init_params(key, state_dim, hidden_dim):
    """PyTorch-Linear-style uniform(-1/sqrt(fan_in), 1/sqrt(fan_in)) init."""
    ks = jax.random.split(key, 6)

    def unif(k, shape, fan_in):
        bound = 1.0 / math.sqrt(fan_in)
        return jax.random.uniform(k, shape, jnp.float32, -bound, bound)

    return {
        "w1": unif(ks[0], (state_dim, hidden_dim), state_dim),
        "b1": unif(ks[1], (hidden_dim,), state_dim),
        "w2": unif(ks[2], (hidden_dim, hidden_dim), hidden_dim),
        "b2": unif(ks[3], (hidden_dim,), hidden_dim),
        "w3": unif(ks[4], (hidden_dim, 1), hidden_dim),
        "b3": unif(ks[5], (1,), hidden_dim),
    }


if __name__ == "__main__":
    key = jax.random.PRNGKey(0)
    k_p, k_x = jax.random.split(key)

    state_dim = 17     # e.g. a MuJoCo-style observation
    hidden_dim = 256   # ValueFunction default
    batch = 200        # not a multiple of the tile -> exercises padded tail

    params = init_params(k_p, state_dim, hidden_dim)
    state = jax.random.normal(k_x, (batch, state_dim), dtype=jnp.float32)

    # With batch=200 the wrapper picks TB=128 -> a 2-step grid (padded tail),
    # which also exercises the v7x two-TensorCore split. Large training
    # batches use the 2048 default tile.
    out = value_function_forward(state, params)
    out = jax.block_until_ready(out)

    ref = value_function_ref(state, params)
    assert out.shape == (batch,), out.shape
    assert jnp.allclose(out, ref, atol=1e-2, rtol=1e-2), float(
        jnp.max(jnp.abs(out - ref))
    )
    print("KERNEL_OK")
</pallas_src>

<mosaic_0001>
module attributes {stable_mosaic.version = 11 : i64} {
  func.func @_value_mlp_kernel(%arg0: i32, %arg1: memref<17x128xbf16, #tpu.memory_space<vmem>>, %arg2: memref<256x17xbf16, #tpu.memory_space<vmem>>, %arg3: memref<256x1xf32, #tpu.memory_space<vmem>>, %arg4: memref<256x256xbf16, #tpu.memory_space<vmem>>, %arg5: memref<256x1xf32, #tpu.memory_space<vmem>>, %arg6: memref<1x256xbf16, #tpu.memory_space<vmem>>, %arg7: memref<1x1xf32, #tpu.memory_space<vmem>>, %arg8: memref<1x128xf32, #tpu.memory_space<vmem>>) attributes {dimension_semantics = [#tpu.dimension_semantics<parallel>], iteration_bounds = array<i64: 2>, scalar_prefetch = 0 : i64, scratch_operands = 0 : i64, tpu.core_type = #tpu.core_type<tc>, window_params = [{transform_indices = @transform_0, window_bounds = array<i64: 17, 128>}, {pipeline_mode = #tpu.pipeline_mode<synchronous>, transform_indices = @transform_1, window_bounds = array<i64: 256, 17>}, {pipeline_mode = #tpu.pipeline_mode<synchronous>, transform_indices = @transform_2, window_bounds = array<i64: 256, 1>}, {pipeline_mode = #tpu.pipeline_mode<synchronous>, transform_indices = @transform_3, window_bounds = array<i64: 256, 256>}, {pipeline_mode = #tpu.pipeline_mode<synchronous>, transform_indices = @transform_4, window_bounds = array<i64: 256, 1>}, {pipeline_mode = #tpu.pipeline_mode<synchronous>, transform_indices = @transform_5, window_bounds = array<i64: 1, 256>}, {pipeline_mode = #tpu.pipeline_mode<synchronous>, transform_indices = @transform_6, window_bounds = array<i64: 1, 1>}, {transform_indices = @transform_7, window_bounds = array<i64: 1, 128>}]} {
    %c0 = arith.constant 0 : index
    %c0_0 = arith.constant 0 : index
    %0 = vector.load %arg2[%c0, %c0_0] : memref<256x17xbf16, #tpu.memory_space<vmem>>, vector<256x17xbf16>
    %c0_1 = arith.constant 0 : index
    %c0_2 = arith.constant 0 : index
    %1 = vector.load %arg1[%c0_1, %c0_2] : memref<17x128xbf16, #tpu.memory_space<vmem>>, vector<17x128xbf16>
    %cst = arith.constant dense<0.000000e+00> : vector<256x128xf32>
    %2 = tpu.matmul %0, %1, %cst {dimension_numbers = #tpu.dot_dimension_numbers<[1], [0], [0], [1], [0, 0, 1, 1], [], []>} : vector<256x17xbf16>, vector<17x128xbf16>, vector<256x128xf32> -> vector<256x128xf32>
    %c0_3 = arith.constant 0 : index
    %c0_4 = arith.constant 0 : index
    %3 = vector.load %arg3[%c0_3, %c0_4] : memref<256x1xf32, #tpu.memory_space<vmem>>, vector<256x1xf32>
    %4 = vector.broadcast %3 : vector<256x1xf32> to vector<256x128xf32>
    %5 = arith.addf %2, %4 : vector<256x128xf32>
    %cst_5 = arith.constant 0.000000e+00 : f32
    %6 = vector.broadcast %cst_5 : f32 to vector<256x128xf32>
    %7 = arith.maximumf %5, %6 : vector<256x128xf32>
    %c0_6 = arith.constant 0 : index
    %c0_7 = arith.constant 0 : index
    %8 = vector.load %arg4[%c0_6, %c0_7] : memref<256x256xbf16, #tpu.memory_space<vmem>>, vector<256x256xbf16>
    %9 = arith.truncf %7 : vector<256x128xf32> to vector<256x128xbf16>
    %cst_8 = arith.constant dense<0.000000e+00> : vector<256x128xf32>
    %10 = tpu.matmul %8, %9, %cst_8 {dimension_numbers = #tpu.dot_dimension_numbers<[1], [0], [0], [1], [0, 0, 1, 1], [], []>} : vector<256x256xbf16>, vector<256x128xbf16>, vector<256x128xf32> -> vector<256x128xf32>
    %c0_9 = arith.constant 0 : index
    %c0_10 = arith.constant 0 : index
    %11 = vector.load %arg5[%c0_9, %c0_10] : memref<256x1xf32, #tpu.memory_space<vmem>>, vector<256x1xf32>
    %12 = vector.broadcast %11 : vector<256x1xf32> to vector<256x128xf32>
    %13 = arith.addf %10, %12 : vector<256x128xf32>
    %cst_11 = arith.constant 0.000000e+00 : f32
    %14 = vector.broadcast %cst_11 : f32 to vector<256x128xf32>
    %15 = arith.maximumf %13, %14 : vector<256x128xf32>
    %c0_12 = arith.constant 0 : index
    %c0_13 = arith.constant 0 : index
    %16 = vector.load %arg6[%c0_12, %c0_13] : memref<1x256xbf16, #tpu.memory_space<vmem>>, vector<1x256xbf16>
    %17 = arith.truncf %15 : vector<256x128xf32> to vector<256x128xbf16>
    %cst_14 = arith.constant dense<0.000000e+00> : vector<1x128xf32>
    %18 = tpu.matmul %16, %17, %cst_14 {dimension_numbers = #tpu.dot_dimension_numbers<[1], [0], [0], [1], [0, 0, 1, 1], [], []>} : vector<1x256xbf16>, vector<256x128xbf16>, vector<1x128xf32> -> vector<1x128xf32>
    %c0_15 = arith.constant 0 : index
    %c0_16 = arith.constant 0 : index
    %19 = vector.load %arg7[%c0_15, %c0_16] : memref<1x1xf32, #tpu.memory_space<vmem>>, vector<1x1xf32>
    %20 = vector.broadcast %19 : vector<1x1xf32> to vector<1x128xf32>
    %21 = arith.addf %18, %20 : vector<1x128xf32>
    %c0_17 = arith.constant 0 : index
    %c0_18 = arith.constant 0 : index
    %22 = vector.load %arg8[%c0_17, %c0_18] : memref<1x128xf32, #tpu.memory_space<vmem>>, vector<1x128xf32>
    tpu.vector_store %arg8[%c0_17, %c0_18], %21 {strides = array<i32>} : memref<1x128xf32, #tpu.memory_space<vmem>>, vector<1x128xf32>,
    return
  }
  func.func @transform_0(%arg0: i32) -> (i32, i32) {
    %c0_i32 = arith.constant 0 : i32
    %c0_i32_0 = arith.constant 0 : i32
    return %c0_i32, %arg0 : i32, i32
  }
  func.func @transform_1(%arg0: i32) -> (i32, i32) {
    %c0_i32 = arith.constant 0 : i32
    %c0_i32_0 = arith.constant 0 : i32
    %c0_i32_1 = arith.constant 0 : i32
    return %c0_i32, %c0_i32_0 : i32, i32
  }
  func.func @transform_2(%arg0: i32) -> (i32, i32) {
    %c0_i32 = arith.constant 0 : i32
    %c0_i32_0 = arith.constant 0 : i32
    %c0_i32_1 = arith.constant 0 : i32
    return %c0_i32, %c0_i32_0 : i32, i32
  }
  func.func @transform_3(%arg0: i32) -> (i32, i32) {
    %c0_i32 = arith.constant 0 : i32
    %c0_i32_0 = arith.constant 0 : i32
    %c0_i32_1 = arith.constant 0 : i32
    return %c0_i32, %c0_i32_0 : i32, i32
  }
  func.func @transform_4(%arg0: i32) -> (i32, i32) {
    %c0_i32 = arith.constant 0 : i32
    %c0_i32_0 = arith.constant 0 : i32
    %c0_i32_1 = arith.constant 0 : i32
    return %c0_i32, %c0_i32_0 : i32, i32
  }
  func.func @transform_5(%arg0: i32) -> (i32, i32) {
    %c0_i32 = arith.constant 0 : i32
    %c0_i32_0 = arith.constant 0 : i32
    %c0_i32_1 = arith.constant 0 : i32
    return %c0_i32, %c0_i32_0 : i32, i32
  }
  func.func @transform_6(%arg0: i32) -> (i32, i32) {
    %c0_i32 = arith.constant 0 : i32
    %c0_i32_0 = arith.constant 0 : i32
    %c0_i32_1 = arith.constant 0 : i32
    return %c0_i32, %c0_i32_0 : i32, i32
  }
  func.func @transform_7(%arg0: i32) -> (i32, i32) {
    %c0_i32 = arith.constant 0 : i32
    %c0_i32_0 = arith.constant 0 : i32
    return %c0_i32, %arg0 : i32, i32
  }
}

</mosaic_0001>

<llo_original>
// kernel: tpu_custom_call.1
$region0: #{tpu_custom_call.1}
  #allocation0 [shape = 'u32[]', space=smem, size = 0x4, offset = 0x4, fixed_abs, tag = 'smem constant byte address 0x4 - core index']
  #allocation1 [shape = 'u32[72,128]{1,0:T(1,128)}', space=vmem, size = 0x9000, scoped, tag = 'internal scratch']
  #allocation2 [shape = 'f32[1,1]{1,0:T(1,128)S(1)}', space=vmem, size = 0x200, scoped, tag = 'scoped memory for tpu_custom_call.1']
  %s0 = inlined_call_operand.vmem [shape: bf16[17,256], index: 0, kind: input, shape index: {}]
  %s1 = inlined_call_operand.vmem [shape: bf16[256,17], index: 1, kind: input, shape index: {}]
  %s2 = inlined_call_operand.vmem [shape: f32[256,1], index: 2, kind: input, shape index: {}]
  %s3 = inlined_call_operand.vmem [shape: bf16[256,256], index: 3, kind: input, shape index: {}]
  %s4 = inlined_call_operand.vmem [shape: f32[256,1], index: 4, kind: input, shape index: {}]
  %s5 = inlined_call_operand.vmem [shape: bf16[1,256], index: 5, kind: input, shape index: {}]
  %s6 = inlined_call_operand.<no memory space> [shape: f32[1,1], index: 6, kind: input, shape index: {}]
  %s7 = inlined_call_operand.hbm [shape: f32[1,256], index: 7, kind: output, shape index: {}]
  %s8 = sld [smem:[#allocation0]]
  $region102: #{tpu_custom_call.1} parent=0
    _
  %s10 = ssub.s32 1, %s8
  %s11 = scalar_select 0, %s10, %s8
  %v12 = vstv %s6
  %13 = vst [vmem:[#allocation2] sm:$0x1] %v12
  $region1: #{tpu_custom_call.1} parent=0
    #allocation3 [shape = 'u8[12288]{0}', space=vmem, size = 0x3000, scoped, tag = 'input window, operand 0']
    #allocation4 [shape = 'u8[1024]{0}', space=vmem, size = 0x400, scoped, tag = 'output window, operand 0']
    #allocation5 [shape = 's32[2]{0}', space=sflag, size = 0x8, scoped, tag = 'scoped memory for tpu_custom_call.1']
    %14 = vsyncpa [#allocation5], 0
    %s15 = scalar_lea.sflag [#allocation5], 1
    %16 = vsyncpa %s15, 0
    loop: start=0, step=1, limit=4
    $region2: #{tpu_custom_call.1} parent=1 // loop_pre_header
      _
    $region3: #{tpu_custom_call.1} parent=1 // loop_header
      %s18 = sphi 0, %s22
      %p19 = scmp.ge.s32.totalorder %s18, 4
      %s28 = sphi 0, %s30
      %s31 = sphi 0, %s28
      %s32 = sphi 0, %s31
      %s48 = sphi 0, %s32
      %s52 = sphi 0, %s52
      %s54 = sphi 0, %s52
      %s55 = sphi 0, %s54
      %s69 = sphi 0, %s55
      %s73 = sphi 0, %s73
      %s75 = sphi 0, %s73
      %s76 = sphi 0, %s75
      %s90 = sphi 0, %s76
      %s94 = sphi 0, %s94
      %s96 = sphi 0, %s94
      %s97 = sphi 0, %s96
      %s111 = sphi 0, %s97
      %s115 = sphi 0, %s115
      %s117 = sphi 0, %s115
      %s118 = sphi 0, %s117
      %s132 = sphi 0, %s118
      %s136 = sphi 0, %s136
      %s138 = sphi 0, %s136
      %s139 = sphi 0, %s138
      %s153 = sphi 0, %s139
      %s157 = sphi 0, %s157
      %s159 = sphi 0, %s157
      %s160 = sphi 0, %s159
      %s174 = sphi 0, %s160
      %s180 = sphi 0, %s182
      %s183 = sphi 0, %s180
      %s184 = sphi 0, %s183
      %s200 = sphi 0, %s184
    $region4: #{tpu_custom_call.1} parent=1 // loop_header_branch
      %21 = sbr.rel (%p19) target = $region8
    $region5: #{tpu_custom_call.1} parent=1 // loop_body
      %s23 = ssub.s32 %s18, 1
      %s24 = ssub.s32 %s18, 2
      %s25 = sadd.s32 %s18, 1
      %s26 = ssub.s32 %s18, %s25
      %p27 = scmp.eq.s32.totalorder %s26, 0
      %s29 = sadd.s32 %s28, 1
      %s30 = scalar_select %p27, %s28, %s29
      %p33 = pneg %p27
      %p34 = scmp.eq.s32.totalorder %s18, 1
      %p35 = por %p33, %p34
      %p36 = scmp.ne.s32.totalorder %s28, %s31
      %p37 = scmp.eq.s32.totalorder %s18, 0
      %p38 = por %p36, %p37
      %p39 = scmp.ne.s32.totalorder %s28, %s31
      %p40 = scmp.eq.s32.totalorder %s23, 1
      %p41 = por %p39, %p40
      %p42 = scmp.ne.s32.totalorder %s31, %s32
      %p43 = scmp.eq.s32.totalorder %s23, 0
      %p44 = por %p42, %p43
      %p45 = scmp.ne.s32.totalorder %s31, %s32
      %p46 = scmp.eq.s32.totalorder %s24, 1
      %p47 = por %p45, %p46
      %p49 = scmp.ne.s32.totalorder %s32, %s48
      %p50 = scmp.eq.s32.totalorder %s24, 0
      %p51 = por %p49, %p50
      %s53 = sadd.s32 %s52, 1
      %p56 = scmp.eq.s32.totalorder %s18, 1
      %p57 = scmp.ne.s32.totalorder %s52, %s54
      %p58 = scmp.eq.s32.totalorder %s18, 0
      %p59 = por %p57, %p58
      %p60 = scmp.ne.s32.totalorder %s52, %s54
      %p61 = scmp.eq.s32.totalorder %s23, 1
      %p62 = por %p60, %p61
      %p63 = scmp.ne.s32.totalorder %s54, %s55
      %p64 = scmp.eq.s32.totalorder %s23, 0
      %p65 = por %p63, %p64
      %p66 = scmp.ne.s32.totalorder %s54, %s55
      %p67 = scmp.eq.s32.totalorder %s24, 1
      %p68 = por %p66, %p67
      %p70 = scmp.ne.s32.totalorder %s55, %s69
      %p71 = scmp.eq.s32.totalorder %s24, 0
      %p72 = por %p70, %p71
      %s74 = sadd.s32 %s73, 1
      %p77 = scmp.eq.s32.totalorder %s18, 1
      %p78 = scmp.ne.s32.totalorder %s73, %s75
      %p79 = scmp.eq.s32.totalorder %s18, 0
      %p80 = por %p78, %p79
      %p81 = scmp.ne.s32.totalorder %s73, %s75
      %p82 = scmp.eq.s32.totalorder %s23, 1
      %p83 = por %p81, %p82
      %p84 = scmp.ne.s32.totalorder %s75, %s76
      %p85 = scmp.eq.s32.totalorder %s23, 0
      %p86 = por %p84, %p85
      %p87 = scmp.ne.s32.totalorder %s75, %s76
      %p88 = scmp.eq.s32.totalorder %s24, 1
      %p89 = por %p87, %p88
      %p91 = scmp.ne.s32.totalorder %s76, %s90
      %p92 = scmp.eq.s32.totalorder %s24, 0
      %p93 = por %p91, %p92
      %s95 = sadd.s32 %s94, 1
      %p98 = scmp.eq.s32.totalorder %s18, 1
      %p99 = scmp.ne.s32.totalorder %s94, %s96
      %p100 = scmp.eq.s32.totalorder %s18, 0
      %p101 = por %p99, %p100
      %p102 = scmp.ne.s32.totalorder %s94, %s96
      %p103 = scmp.eq.s32.totalorder %s23, 1
      %p104 = por %p102, %p103
      %p105 = scmp.ne.s32.totalorder %s96, %s97
      %p106 = scmp.eq.s32.totalorder %s23, 0
      %p107 = por %p105, %p106
      %p108 = scmp.ne.s32.totalorder %s96, %s97
      %p109 = scmp.eq.s32.totalorder %s24, 1
      %p110 = por %p108, %p109
      %p112 = scmp.ne.s32.totalorder %s97, %s111
      %p113 = scmp.eq.s32.totalorder %s24, 0
      %p114 = por %p112, %p113
      %s116 = sadd.s32 %s115, 1
      %p119 = scmp.eq.s32.totalorder %s18, 1
      %p120 = scmp.ne.s32.totalorder %s115, %s117
      %p121 = scmp.eq.s32.totalorder %s18, 0
      %p122 = por %p120, %p121
      %p123 = scmp.ne.s32.totalorder %s115, %s117
      %p124 = scmp.eq.s32.totalorder %s23, 1
      %p125 = por %p123, %p124
      %p126 = scmp.ne.s32.totalorder %s117, %s118
      %p127 = scmp.eq.s32.totalorder %s23, 0
      %p128 = por %p126, %p127
      %p129 = scmp.ne.s32.totalorder %s117, %s118
      %p130 = scmp.eq.s32.totalorder %s24, 1
      %p131 = por %p129, %p130
      %p133 = scmp.ne.s32.totalorder %s118, %s132
      %p134 = scmp.eq.s32.totalorder %s24, 0
      %p135 = por %p133, %p134
      %s137 = sadd.s32 %s136, 1
      %p140 = scmp.eq.s32.totalorder %s18, 1
      %p141 = scmp.ne.s32.totalorder %s136, %s138
      %p142 = scmp.eq.s32.totalorder %s18, 0
      %p143 = por %p141, %p142
      %p144 = scmp.ne.s32.totalorder %s136, %s138
      %p145 = scmp.eq.s32.totalorder %s23, 1
      %p146 = por %p144, %p145
      %p147 = scmp.ne.s32.totalorder %s138, %s139
      %p148 = scmp.eq.s32.totalorder %s23, 0
      %p149 = por %p147, %p148
      %p150 = scmp.ne.s32.totalorder %s138, %s139
      %p151 = scmp.eq.s32.totalorder %s24, 1
      %p152 = por %p150, %p151
      %p154 = scmp.ne.s32.totalorder %s139, %s153
      %p155 = scmp.eq.s32.totalorder %s24, 0
      %p156 = por %p154, %p155
      %s158 = sadd.s32 %s157, 1
      %p161 = scmp.eq.s32.totalorder %s18, 1
      %p162 = scmp.ne.s32.totalorder %s157, %s159
      %p163 = scmp.eq.s32.totalorder %s18, 0
      %p164 = por %p162, %p163
      %p165 = scmp.ne.s32.totalorder %s157, %s159
      %p166 = scmp.eq.s32.totalorder %s23, 1
      %p167 = por %p165, %p166
      %p168 = scmp.ne.s32.totalorder %s159, %s160
      %p169 = scmp.eq.s32.totalorder %s23, 0
      %p170 = por %p168, %p169
      %p171 = scmp.ne.s32.totalorder %s159, %s160
      %p172 = scmp.eq.s32.totalorder %s24, 1
      %p173 = por %p171, %p172
      %p175 = scmp.ne.s32.totalorder %s160, %s174
      %p176 = scmp.eq.s32.totalorder %s24, 0
      %p177 = por %p175, %p176
      %s178 = ssub.s32 %s18, %s25
      %p179 = scmp.eq.s32.totalorder %s178, 0
      %s181 = sadd.s32 %s180, 1
      %s182 = scalar_select %p179, %s180, %s181
      %p185 = pneg %p179
      %p186 = scmp.eq.s32.totalorder %s18, 1
      %p187 = por %p185, %p186
      %p188 = scmp.ne.s32.totalorder %s180, %s183
      %p189 = scmp.eq.s32.totalorder %s18, 0
      %p190 = por %p188, %p189
      %p191 = scmp.ne.s32.totalorder %s180, %s183
      %p192 = scmp.eq.s32.totalorder %s23, 1
      %p193 = por %p191, %p192
      %p194 = scmp.ne.s32.totalorder %s183, %s184
      %p195 = scmp.eq.s32.totalorder %s23, 0
      %p196 = por %p194, %p195
      %p197 = scmp.ne.s32.totalorder %s183, %s184
      %p198 = scmp.eq.s32.totalorder %s24, 1
      %p199 = por %p197, %p198
      %p201 = scmp.ne.s32.totalorder %s184, %s200
      %p202 = scmp.eq.s32.totalorder %s24, 0
      %p203 = por %p201, %p202
      %p204 = scmp.le.s32.totalorder 1, %s18
      %p205 = scmp.lt.s32.totalorder %s18, 3
      %p206 = pnand %p204, %p205
      %p207 = pneg %p206
      // Predicated region
      $region9: #{tpu_custom_call.1} parent=5 // pred_check
        _
      $region10: #{tpu_custom_call.1} parent=5 // pred_check_branch
        %209 = sbr.rel (%p206) target = $region12
      $region11: #{tpu_custom_call.1} parent=5 // pred_region
        %s210 = ssub.s32 %s18, 1
        // Predicated region
        $region13: #{tpu_custom_call.1} parent=11 // pred_check
          %p211 = pneg %p65
        $region14: #{tpu_custom_call.1} parent=11 // pred_check_branch
          %213 = sbr.rel (%p211) target = $region16
        $region15: #{tpu_custom_call.1} parent=11 // pred_region
          _
        $region16: #{tpu_custom_call.1} parent=11 // pred_fallthru
          _
        // Predicated region
        $region17: #{tpu_custom_call.1} parent=11 // pred_check
          %p214 = pneg %p86
        $region18: #{tpu_custom_call.1} parent=11 // pred_check_branch
          %216 = sbr.rel (%p214) target = $region20
        $region19: #{tpu_custom_call.1} parent=11 // pred_region
          _
        $region20: #{tpu_custom_call.1} parent=11 // pred_fallthru
          _
        // Predicated region
        $region21: #{tpu_custom_call.1} parent=11 // pred_check
          %p217 = pneg %p107
        $region22: #{tpu_custom_call.1} parent=11 // pred_check_branch
          %219 = sbr.rel (%p217) target = $region24
        $region23: #{tpu_custom_call.1} parent=11 // pred_region
          _
        $region24: #{tpu_custom_call.1} parent=11 // pred_fallthru
          _
        // Predicated region
        $region25: #{tpu_custom_call.1} parent=11 // pred_check
          %p220 = pneg %p128
        $region26: #{tpu_custom_call.1} parent=11 // pred_check_branch
          %222 = sbr.rel (%p220) target = $region28
        $region27: #{tpu_custom_call.1} parent=11 // pred_region
          _
        $region28: #{tpu_custom_call.1} parent=11 // pred_fallthru
          _
        // Predicated region
        $region29: #{tpu_custom_call.1} parent=11 // pred_check
          %p223 = pneg %p149
        $region30: #{tpu_custom_call.1} parent=11 // pred_check_branch
          %225 = sbr.rel (%p223) target = $region32
        $region31: #{tpu_custom_call.1} parent=11 // pred_region
          _
        $region32: #{tpu_custom_call.1} parent=11 // pred_fallthru
          _
        // Predicated region
        $region33: #{tpu_custom_call.1} parent=11 // pred_check
          %p226 = pneg %p170
        $region34: #{tpu_custom_call.1} parent=11 // pred_check_branch
          %228 = sbr.rel (%p226) target = $region36
        $region35: #{tpu_custom_call.1} parent=11 // pred_region
          _
        $region36: #{tpu_custom_call.1} parent=11 // pred_fallthru
          _
      $region12: #{tpu_custom_call.1} parent=5 // pred_fallthru
        _
      %p229 = scmp.lt.s32.totalorder %s18, 2
      // Predicated region
      $region37: #{tpu_custom_call.1} parent=5 // pred_check
        %p230 = pneg %p229
      $region38: #{tpu_custom_call.1} parent=5 // pred_check_branch
        %232 = sbr.rel (%p230) target = $region40
      $region39: #{tpu_custom_call.1} parent=5 // pred_region
        // Predicated region
        $region41: #{tpu_custom_call.1} parent=39 // pred_check
          %p233 = pneg %p38
        $region42: #{tpu_custom_call.1} parent=39 // pred_check_branch
          %235 = sbr.rel (%p233) target = $region44
        $region43: #{tpu_custom_call.1} parent=39 // pred_region
          %s236 = sand.u32 %s28, 1
          %s237 = sand.u32 %s28, 1
          %s238 = smul.addr %s237, 12
          %s239 = scalar_lea.vmem [#allocation3], %s238
          %s240 = smul.addr %s18, 4
          %s241 = scalar_lea.vmem %s0, %s240
          // Predicated region
          $region45: #{tpu_custom_call.1} parent=43 // pred_check
            _
          $region46: #{tpu_custom_call.1} parent=43 // pred_check_branch
            %243 = sbr.rel (0) target = $region48
          $region47: #{tpu_custom_call.1} parent=43 // pred_region
            // Predicated region
            $region49: #{tpu_custom_call.1} parent=47 // pred_check
              _
            $region50: #{tpu_custom_call.1} parent=47 // pred_check_branch
              %245 = sbr.rel target = $region52
            $region51: #{tpu_custom_call.1} parent=47 // pred_region
              // Predicated region
              $region64: #{tpu_custom_call.1} parent=51 // pred_check
                _
              $region65: #{tpu_custom_call.1} parent=51 // pred_check_branch
                %265 = sbr.rel (0) target = $region67
              $region66: #{tpu_custom_call.1} parent=51 // pred_region
                loop: start=0, step=1, limit=1
                $region68: #{tpu_custom_call.1} parent=66 // loop_pre_header
                  _
                $region69: #{tpu_custom_call.1} parent=66 // loop_header
                  %s267 = sphi 0, %s271
                  %p268 = scmp.ge.s32.totalorder %s267, 1
                  %s272 = sphi %s241, %s241
                  %s273 = sphi %s239, %s239
                $region70: #{tpu_custom_call.1} parent=66 // loop_header_branch
                  %270 = sbr.rel (%p268) target = $region74
                $region71: #{tpu_custom_call.1} parent=66 // loop_body
                  _
                $region72: #{tpu_custom_call.1} parent=66 // loop_footer
                  %s271 = sadd.s32 1, %s267
                $region73: #{tpu_custom_call.1} parent=66 // loop_footer_branch
                  %266 = sbr.rel target = $region69
                $region74: #{tpu_custom_call.1} parent=66 // loop_exit
                  _
                %s275 = ssub.s32 16, 1
                loop: start=0, step=1, limit=1
                $region75: #{tpu_custom_call.1} parent=66 // loop_pre_header
                  _
                $region76: #{tpu_custom_call.1} parent=66 // loop_header
                  %s277 = sphi 0, %s281
                  %p278 = scmp.ge.s32.totalorder %s277, 1
                  %s282 = sphi %s241, %s241
                  %s283 = sphi %s239, %s239
                $region77: #{tpu_custom_call.1} parent=66 // loop_header_branch
                  %280 = sbr.rel (%p278) target = $region81
                $region78: #{tpu_custom_call.1} parent=66 // loop_body
                  %v284 = vld [vmem:[%s282] sm:%s275]
                  %285 = vst [vmem:[%s283] sm:%s275] %v284
                  %v286 = vld [vmem:[%s282 + $0x8] sm:%s275]
                  %287 = vst [vmem:[%s283 + $0x4] sm:%s275] %v286
                  %v288 = vld [vmem:[%s282 + $0x10] sm:%s275]
                  %289 = vst [vmem:[%s283 + $0x8] sm:%s275] %v288
                $region79: #{tpu_custom_call.1} parent=66 // loop_footer
                  %s281 = sadd.s32 1, %s277
                $region80: #{tpu_custom_call.1} parent=66 // loop_footer_branch
                  %276 = sbr.rel target = $region76
                $region81: #{tpu_custom_call.1} parent=66 // loop_exit
                  _
              $region67: #{tpu_custom_call.1} parent=51 // pred_fallthru
                _
            $region52: #{tpu_custom_call.1} parent=47 // pred_fallthru
              _
            // Predicated region
            $region53: #{tpu_custom_call.1} parent=47 // pred_check
              _
            $region54: #{tpu_custom_call.1} parent=47 // pred_check_branch
              %247 = sbr.rel (0) target = $region56
            $region55: #{tpu_custom_call.1} parent=47 // pred_region
              %s249 = ssub.s32 16, 1
              loop: start=0, step=1, limit=1
              $region57: #{tpu_custom_call.1} parent=55 // loop_pre_header
                _
              $region58: #{tpu_custom_call.1} parent=55 // loop_header
                %s251 = sphi 0, %s255
                %p252 = scmp.ge.s32.totalorder %s251, 1
                %s256 = sphi %s241, %s241
                %s257 = sphi %s239, %s239
              $region59: #{tpu_custom_call.1} parent=55 // loop_header_branch
                %254 = sbr.rel (%p252) target = $region63
              $region60: #{tpu_custom_call.1} parent=55 // loop_body
                %v258 = vld [vmem:[%s256] sm:%s249]
                %259 = vst [vmem:[%s257] sm:%s249] %v258
                %v260 = vld [vmem:[%s256 + $0x8] sm:%s249]
                %261 = vst [vmem:[%s257 + $0x4] sm:%s249] %v260
                %v262 = vld [vmem:[%s256 + $0x10] sm:%s249]
                %263 = vst [vmem:[%s257 + $0x8] sm:%s249] %v262
              $region61: #{tpu_custom_call.1} parent=55 // loop_footer
                %s255 = sadd.s32 1, %s251
              $region62: #{tpu_custom_call.1} parent=55 // loop_footer_branch
                %250 = sbr.rel target = $region58
              $region63: #{tpu_custom_call.1} parent=55 // loop_exit
                _
            $region56: #{tpu_custom_call.1} parent=47 // pred_fallthru
              _
          $region48: #{tpu_custom_call.1} parent=43 // pred_fallthru
            _
          %290 = vnop
        $region44: #{tpu_custom_call.1} parent=39 // pred_fallthru
          _
      $region40: #{tpu_custom_call.1} parent=5 // pred_fallthru
        _
      %p291 = scmp.le.s32.totalorder 1, %s18
      %p292 = scmp.lt.s32.totalorder %s18, 3
      %p293 = pnand %p291, %p292
      %p294 = pneg %p293
      // Predicated region
      $region82: #{tpu_custom_call.1} parent=5 // pred_check
        _
      $region83: #{tpu_custom_call.1} parent=5 // pred_check_branch
        %296 = sbr.rel (%p293) target = $region85
      $region84: #{tpu_custom_call.1} parent=5 // pred_region
        %s297 = ssub.s32 %s18, 1
        %s298 = sand.u32 %s31, 1
        %s299 = sand.u32 %s31, 1
        %s300 = smul.addr %s299, 12
        %s301 = scalar_lea.vmem [#allocation3], %s300
        // Predicated region
        $region86: #{tpu_custom_call.1} parent=84 // pred_check
          %p302 = pneg %p44
        $region87: #{tpu_custom_call.1} parent=84 // pred_check_branch
          %304 = sbr.rel (%p302) target = $region89
        $region88: #{tpu_custom_call.1} parent=84 // pred_region
          _
        $region89: #{tpu_custom_call.1} parent=84 // pred_fallthru
          _
        %s305 = sand.u32 %s31, 1
        %s306 = sand.u32 %s31, 1
        %s307 = smul.addr %s306, 12
        %s308 = scalar_lea.vmem [#allocation3], %s307
        %p309 = pneg %p44
        %p310 = pneg %p41
        %p311 = pneg %p65
        %p312 = pneg %p62
        %p313 = pneg %p86
        %p314 = pneg %p83
        %p315 = pneg %p107
        %p316 = pneg %p104
        %p317 = pneg %p128
        %p318 = pneg %p125
        %p319 = pneg %p149
        %p320 = pneg %p146
        %p321 = pneg %p170
        %p322 = pneg %p167
        %p323 = pneg %p196
        %p324 = pneg %p193
        %s325 = sand.u32 %s183, 1
        %s326 = scalar_lea.sflag [#allocation5], %s325
        %s327 = sand.u32 %s183, 1
        %s328 = scalar_lea.vmem [#allocation4], %s327
        %v330 = vld [vmem:[%s1] sm:$0xf]
        %v331 = vld [vmem:[%s1 + $0x4] sm:$0xf]
        %v332 = vld [vmem:[%s1 + $0x8] sm:$0xf]
        %v333 = vld [vmem:[%s1 + $0xc] sm:$0xf]
        %v334 = vld [vmem:[%s1 + $0x10] sm:$0xf]
        %v335 = vld [vmem:[%s1 + $0x14] sm:$0xf]
        %v336 = vld [vmem:[%s1 + $0x18] sm:$0xf]
        %v337 = vld [vmem:[%s1 + $0x1c] sm:$0xf]
        %v338 = vld [vmem:[%s1 + $0x20] sm:$0xf]
        %v339 = vld [vmem:[%s1 + $0x24] sm:$0xf]
        %v340 = vld [vmem:[%s1 + $0x28] sm:$0xf]
        %v341 = vld [vmem:[%s1 + $0x2c] sm:$0xf]
        %v342 = vld [vmem:[%s1 + $0x30] sm:$0xf]
        %v343 = vld [vmem:[%s1 + $0x34] sm:$0xf]
        %v344 = vld [vmem:[%s1 + $0x38] sm:$0xf]
        %v345 = vld [vmem:[%s1 + $0x3c] sm:$0xf]
        %v346 = vld [vmem:[%s1 + $0x40] sm:$0xf]
        %v347 = vld [vmem:[%s1 + $0x44] sm:$0xf]
        %v348 = vld [vmem:[%s1 + $0x48] sm:$0xf]
        %v349 = vld [vmem:[%s1 + $0x4c] sm:$0xf]
        %v350 = vld [vmem:[%s1 + $0x50] sm:$0xf]
        %v351 = vld [vmem:[%s1 + $0x54] sm:$0xf]
        %v352 = vld [vmem:[%s1 + $0x58] sm:$0xf]
        %v353 = vld [vmem:[%s1 + $0x5c] sm:$0xf]
        %v354 = vld [vmem:[%s1 + $0x60] sm:$0xf]
        %v355 = vld [vmem:[%s1 + $0x64] sm:$0xf]
        %v356 = vld [vmem:[%s1 + $0x68] sm:$0xf]
        %v357 = vld [vmem:[%s1 + $0x6c] sm:$0xf]
        %v358 = vld [vmem:[%s1 + $0x70] sm:$0xf]
        %v359 = vld [vmem:[%s1 + $0x74] sm:$0xf]
        %v360 = vld [vmem:[%s1 + $0x78] sm:$0xf]
        %v361 = vld [vmem:[%s1 + $0x7c] sm:$0xf]
        %v362 = vld [vmem:[%s301] sm:$0xf]
        %v363 = vld [vmem:[%s301 + $0x4] sm:$0xf]
        %v364 = vld [vmem:[%s301 + $0x8] sm:$0x1]
        %v365 = vld [vmem:[%s2] sm:$0xff]
        %v366 = vld [vmem:[%s2 + $0x8] sm:$0xff]
        %v367 = vld [vmem:[%s2 + $0x10] sm:$0xff]
        %v368 = vld [vmem:[%s2 + $0x18] sm:$0xff]
        %v369 = vld [vmem:[%s2 + $0x20] sm:$0xff]
        %v370 = vld [vmem:[%s2 + $0x28] sm:$0xff]
        %v371 = vld [vmem:[%s2 + $0x30] sm:$0xff]
        %v372 = vld [vmem:[%s2 + $0x38] sm:$0xff]
        %v373 = vld [vmem:[%s2 + $0x40] sm:$0xff]
        %v374 = vld [vmem:[%s2 + $0x48] sm:$0xff]
        %v375 = vld [vmem:[%s2 + $0x50] sm:$0xff]
        %v376 = vld [vmem:[%s2 + $0x58] sm:$0xff]
        %v377 = vld [vmem:[%s2 + $0x60] sm:$0xff]
        %v378 = vld [vmem:[%s2 + $0x68] sm:$0xff]
        %v379 = vld [vmem:[%s2 + $0x70] sm:$0xff]
        %v380 = vld [vmem:[%s2 + $0x78] sm:$0xff]
        %v381 = vld [vmem:[%s2 + $0x80] sm:$0xff]
        %v382 = vld [vmem:[%s2 + $0x88] sm:$0xff]
        %v383 = vld [vmem:[%s2 + $0x90] sm:$0xff]
        %v384 = vld [vmem:[%s2 + $0x98] sm:$0xff]
        %v385 = vld [vmem:[%s2 + $0xa0] sm:$0xff]
        %v386 = vld [vmem:[%s2 + $0xa8] sm:$0xff]
        %v387 = vld [vmem:[%s2 + $0xb0] sm:$0xff]
        %v388 = vld [vmem:[%s2 + $0xb8] sm:$0xff]
        %v389 = vld [vmem:[%s2 + $0xc0] sm:$0xff]
        %v390 = vld [vmem:[%s2 + $0xc8] sm:$0xff]
        %v391 = vld [vmem:[%s2 + $0xd0] sm:$0xff]
        %v392 = vld [vmem:[%s2 + $0xd8] sm:$0xff]
        %v393 = vld [vmem:[%s2 + $0xe0] sm:$0xff]
        %v394 = vld [vmem:[%s2 + $0xe8] sm:$0xff]
        %v395 = vld [vmem:[%s2 + $0xf0] sm:$0xff]
        %v396 = vld [vmem:[%s2 + $0xf8] sm:$0xff]
        %398 = vset.pattern.permute.xlu0 0
        %399 = vperm.xlu0 %398, %v365
        %v400 = vpop.permute.xlu0 %399
        %403 = vset.pattern.permute.xlu0 0
        %404 = vperm.xlu0 %403, %v366
        %v405 = vpop.permute.xlu0 %404
        %408 = vset.pattern.permute.xlu0 0
        %409 = vperm.xlu0 %408, %v367
        %v410 = vpop.permute.xlu0 %409
        %413 = vset.pattern.permute.xlu0 0
        %414 = vperm.xlu0 %413, %v368
        %v415 = vpop.permute.xlu0 %414
        %418 = vset.pattern.permute.xlu0 0
        %419 = vperm.xlu0 %418, %v369
        %v420 = vpop.permute.xlu0 %419
        %423 = vset.pattern.permute.xlu0 0
        %424 = vperm.xlu0 %423, %v370
        %v425 = vpop.permute.xlu0 %424
        %428 = vset.pattern.permute.xlu0 0
        %429 = vperm.xlu0 %428, %v371
        %v430 = vpop.permute.xlu0 %429
        %433 = vset.pattern.permute.xlu0 0
        %434 = vperm.xlu0 %433, %v372
        %v435 = vpop.permute.xlu0 %434
        %438 = vset.pattern.permute.xlu0 0
        %439 = vperm.xlu0 %438, %v373
        %v440 = vpop.permute.xlu0 %439
        %443 = vset.pattern.permute.xlu0 0
        %444 = vperm.xlu0 %443, %v374
        %v445 = vpop.permute.xlu0 %444
        %448 = vset.pattern.permute.xlu0 0
        %449 = vperm.xlu0 %448, %v375
        %v450 = vpop.permute.xlu0 %449
        %453 = vset.pattern.permute.xlu0 0
        %454 = vperm.xlu0 %453, %v376
        %v455 = vpop.permute.xlu0 %454
        %458 = vset.pattern.permute.xlu0 0
        %459 = vperm.xlu0 %458, %v377
        %v460 = vpop.permute.xlu0 %459
        %463 = vset.pattern.permute.xlu0 0
        %464 = vperm.xlu0 %463, %v378
        %v465 = vpop.permute.xlu0 %464
        %468 = vset.pattern.permute.xlu0 0
        %469 = vperm.xlu0 %468, %v379
        %v470 = vpop.permute.xlu0 %469
        %473 = vset.pattern.permute.xlu0 0
        %474 = vperm.xlu0 %473, %v380
        %v475 = vpop.permute.xlu0 %474
        %478 = vset.pattern.permute.xlu0 0
        %479 = vperm.xlu0 %478, %v381
        %v480 = vpop.permute.xlu0 %479
        %483 = vset.pattern.permute.xlu0 0
        %484 = vperm.xlu0 %483, %v382
        %v485 = vpop.permute.xlu0 %484
        %488 = vset.pattern.permute.xlu0 0
        %489 = vperm.xlu0 %488, %v383
        %v490 = vpop.permute.xlu0 %489
        %493 = vset.pattern.permute.xlu0 0
        %494 = vperm.xlu0 %493, %v384
        %v495 = vpop.permute.xlu0 %494
        %498 = vset.pattern.permute.xlu0 0
        %499 = vperm.xlu0 %498, %v385
        %v500 = vpop.permute.xlu0 %499
        %503 = vset.pattern.permute.xlu0 0
        %504 = vperm.xlu0 %503, %v386
        %v505 = vpop.permute.xlu0 %504
        %508 = vset.pattern.permute.xlu0 0
        %509 = vperm.xlu0 %508, %v387
        %v510 = vpop.permute.xlu0 %509
        %513 = vset.pattern.permute.xlu0 0
        %514 = vperm.xlu0 %513, %v388
        %v515 = vpop.permute.xlu0 %514
        %518 = vset.pattern.permute.xlu0 0
        %519 = vperm.xlu0 %518, %v389
        %v520 = vpop.permute.xlu0 %519
        %523 = vset.pattern.permute.xlu0 0
        %524 = vperm.xlu0 %523, %v390
        %v525 = vpop.permute.xlu0 %524
        %528 = vset.pattern.permute.xlu0 0
        %529 = vperm.xlu0 %528, %v391
        %v530 = vpop.permute.xlu0 %529
        %533 = vset.pattern.permute.xlu0 0
        %534 = vperm.xlu0 %533, %v392
        %v535 = vpop.permute.xlu0 %534
        %538 = vset.pattern.permute.xlu0 0
        %539 = vperm.xlu0 %538, %v393
        %v540 = vpop.permute.xlu0 %539
        %543 = vset.pattern.permute.xlu0 0
        %544 = vperm.xlu0 %543, %v394
        %v545 = vpop.permute.xlu0 %544
        %548 = vset.pattern.permute.xlu0 0
        %549 = vperm.xlu0 %548, %v395
        %v550 = vpop.permute.xlu0 %549
        %553 = vset.pattern.permute.xlu0 0
        %554 = vperm.xlu0 %553, %v396
        %v555 = vpop.permute.xlu0 %554
        %v589 = vunpack.c.l.b16 %v330
        %v590 = vunpack.c.l.b16 %v331
        %v591 = vunpack.c.l.b16 %v332
        %v592 = vunpack.c.l.b16 %v333
        %v593 = vunpack.c.l.b16 %v334
        %v594 = vunpack.c.l.b16 %v335
        %v595 = vunpack.c.l.b16 %v336
        %v596 = vunpack.c.l.b16 %v337
        %v597 = vunpack.c.l.b16 %v338
        %v598 = vunpack.c.l.b16 %v339
        %v599 = vunpack.c.l.b16 %v340
        %v600 = vunpack.c.l.b16 %v341
        %v601 = vunpack.c.l.b16 %v342
        %v602 = vunpack.c.l.b16 %v343
        %v603 = vunpack.c.l.b16 %v344
        %v604 = vunpack.c.l.b16 %v345
        %v605 = vunpack.c.l.b16 %v346
        %v606 = vunpack.c.l.b16 %v347
        %v607 = vunpack.c.l.b16 %v348
        %v608 = vunpack.c.l.b16 %v349
        %v609 = vunpack.c.l.b16 %v350
        %v610 = vunpack.c.l.b16 %v351
        %v611 = vunpack.c.l.b16 %v352
        %v612 = vunpack.c.l.b16 %v353
        %v613 = vunpack.c.l.b16 %v354
        %v614 = vunpack.c.l.b16 %v355
        %v615 = vunpack.c.l.b16 %v356
        %v616 = vunpack.c.l.b16 %v357
        %v617 = vunpack.c.l.b16 %v358
        %v618 = vunpack.c.l.b16 %v359
        %v619 = vunpack.c.l.b16 %v360
        %v620 = vunpack.c.l.b16 %v361
        %v621 = vpack.c.b16 %v590, %v589
        %v622 = vpack.c.b16 %v592, %v591
        %v623 = vpack.c.b16 %v594, %v593
        %v624 = vpack.c.b16 %v596, %v595
        %v625 = vpack.c.b16 %v598, %v597
        %v626 = vpack.c.b16 %v600, %v599
        %v627 = vpack.c.b16 %v602, %v601
        %v628 = vpack.c.b16 %v604, %v603
        %v629 = vpack.c.b16 %v606, %v605
        %v630 = vpack.c.b16 %v608, %v607
        %v631 = vpack.c.b16 %v610, %v609
        %v632 = vpack.c.b16 %v612, %v611
        %v633 = vpack.c.b16 %v614, %v613
        %v634 = vpack.c.b16 %v616, %v615
        %v635 = vpack.c.b16 %v618, %v617
        %v636 = vpack.c.b16 %v620, %v619
        %v640 = vunpack.c.l.b16 %v362
        %v641 = vunpack.c.l.b16 %v363
        %v642 = vunpack.c.l.b16 %v364
        %v643 = vpack.c.b16 %v641, %v640
        %v644 = vpack.c.b16 %v642, %v642
        %vm646 = vcmask 138240
        %v648 = vsel %vm646, %v621, 0
        %v651 = vsel %vm646, %v622, 0
        %v654 = vsel %vm646, %v623, 0
        %v657 = vsel %vm646, %v624, 0
        %v660 = vsel %vm646, %v625, 0
        %v663 = vsel %vm646, %v626, 0
        %v666 = vsel %vm646, %v627, 0
        %v669 = vsel %vm646, %v628, 0
        %v672 = vsel %vm646, %v629, 0
        %v675 = vsel %vm646, %v630, 0
        %v678 = vsel %vm646, %v631, 0
        %v681 = vsel %vm646, %v632, 0
        %v684 = vsel %vm646, %v633, 0
        %v687 = vsel %vm646, %v634, 0
        %v690 = vsel %vm646, %v635, 0
        %v693 = vsel %vm646, %v636, 0
        %vm695 = vcmask 1040384
        %v696 = vsel 0, 4294967295, 65535
        %v697 = vsel %vm695, %v696, 0
        %v699 = vand.u32 %v644, %v697
        %701 = vmatpush.bf16.msra.mxu0 0
        %702 = vmatpush.bf16.msra.mxu0 0
        %703 = vmatpush.bf16.msra.mxu0 0
        %704 = vmatpush.bf16.msra.mxu0 0
        %705 = vmatpush.bf16.msra.mxu0 0
        %706 = vmatpush.bf16.msra.mxu0 0
        %707 = vmatpush.bf16.msra.mxu0 %v699
        %708 = vmatpush.bf16.msra.mxu0 %v643
        %709 = vmatmul.bf16.gmra.mxu0 %v648
        %v710 = vpop.f32.mrf.mxu0
        %v711 = vadd.f32 %v400, %v710
        %v712 = vpop.f32.mrf.mxu0
        %v713 = vadd.f32 %v405, %v712
        %714 = vmatmul.bf16.gmra.mxu0 %v651
        %v715 = vpop.f32.mrf.mxu0
        %v716 = vadd.f32 %v410, %v715
        %v717 = vpop.f32.mrf.mxu0
        %v718 = vadd.f32 %v415, %v717
        %719 = vmatmul.bf16.gmra.mxu0 %v654
        %v720 = vpop.f32.mrf.mxu0
        %v721 = vadd.f32 %v420, %v720
        %v722 = vpop.f32.mrf.mxu0
        %v723 = vadd.f32 %v425, %v722
        %724 = vmatmul.bf16.gmra.mxu0 %v657
        %v725 = vpop.f32.mrf.mxu0
        %v726 = vadd.f32 %v430, %v725
        %v727 = vpop.f32.mrf.mxu0
        %v728 = vadd.f32 %v435, %v727
        %729 = vmatmul.bf16.gmra.mxu0 %v660
        %v730 = vpop.f32.mrf.mxu0
        %v731 = vadd.f32 %v440, %v730
        %v732 = vpop.f32.mrf.mxu0
        %v733 = vadd.f32 %v445, %v732
        %734 = vmatmul.bf16.gmra.mxu0 %v663
        %v735 = vpop.f32.mrf.mxu0
        %v736 = vadd.f32 %v450, %v735
        %v737 = vpop.f32.mrf.mxu0
        %v738 = vadd.f32 %v455, %v737
        %739 = vmatmul.bf16.gmra.mxu0 %v666
        %v740 = vpop.f32.mrf.mxu0
        %v741 = vadd.f32 %v460, %v740
        %v742 = vpop.f32.mrf.mxu0
        %v743 = vadd.f32 %v465, %v742
        %744 = vmatmul.bf16.gmra.mxu0 %v669
        %v745 = vpop.f32.mrf.mxu0
        %v746 = vadd.f32 %v470, %v745
        %v747 = vpop.f32.mrf.mxu0
        %v748 = vadd.f32 %v475, %v747
        %749 = vmatmul.bf16.gmra.mxu0 %v672
        %v750 = vpop.f32.mrf.mxu0
        %v751 = vadd.f32 %v480, %v750
        %v752 = vpop.f32.mrf.mxu0
        %v753 = vadd.f32 %v485, %v752
        %754 = vmatmul.bf16.gmra.mxu0 %v675
        %v755 = vpop.f32.mrf.mxu0
        %v756 = vadd.f32 %v490, %v755
        %v757 = vpop.f32.mrf.mxu0
        %v758 = vadd.f32 %v495, %v757
        %759 = vmatmul.bf16.gmra.mxu0 %v678
        %v760 = vpop.f32.mrf.mxu0
        %v761 = vadd.f32 %v500, %v760
        %v762 = vpop.f32.mrf.mxu0
        %v763 = vadd.f32 %v505, %v762
        %764 = vmatmul.bf16.gmra.mxu0 %v681
        %v765 = vpop.f32.mrf.mxu0
        %v766 = vadd.f32 %v510, %v765
        %v767 = vpop.f32.mrf.mxu0
        %v768 = vadd.f32 %v515, %v767
        %769 = vmatmul.bf16.gmra.mxu0 %v684
        %v770 = vpop.f32.mrf.mxu0
        %v771 = vadd.f32 %v520, %v770
        %v772 = vpop.f32.mrf.mxu0
        %v773 = vadd.f32 %v525, %v772
        %774 = vmatmul.bf16.gmra.mxu0 %v687
        %v775 = vpop.f32.mrf.mxu0
        %v776 = vadd.f32 %v530, %v775
        %v777 = vpop.f32.mrf.mxu0
        %v778 = vadd.f32 %v535, %v777
        %779 = vmatmul.bf16.gmra.mxu0 %v690
        %v780 = vpop.f32.mrf.mxu0
        %v781 = vadd.f32 %v540, %v780
        %v782 = vpop.f32.mrf.mxu0
        %v783 = vadd.f32 %v545, %v782
        %784 = vmatmul.bf16.gmra.mxu0 %v693
        %v785 = vpop.f32.mrf.mxu0
        %v786 = vadd.f32 %v550, %v785
        %v787 = vpop.f32.mrf.mxu0
        %v788 = vadd.f32 %v555, %v787
        %789 = vdwg.mxu0
        %v790 = vmax.f32 %v711, 0.0
        %v791 = vmax.f32 %v713, 0.0
        %v792 = vmax.f32 %v716, 0.0
        %v793 = vmax.f32 %v718, 0.0
        %v794 = vmax.f32 %v721, 0.0
        %v795 = vmax.f32 %v723, 0.0
        %v796 = vmax.f32 %v726, 0.0
        %v797 = vmax.f32 %v728, 0.0
        %v798 = vmax.f32 %v731, 0.0
        %v799 = vmax.f32 %v733, 0.0
        %v800 = vmax.f32 %v736, 0.0
        %v801 = vmax.f32 %v738, 0.0
        %v802 = vmax.f32 %v741, 0.0
        %v803 = vmax.f32 %v743, 0.0
        %v804 = vmax.f32 %v746, 0.0
        %v805 = vmax.f32 %v748, 0.0
        %v806 = vmax.f32 %v751, 0.0
        %v807 = vmax.f32 %v753, 0.0
        %v808 = vmax.f32 %v756, 0.0
        %v809 = vmax.f32 %v758, 0.0
        %v810 = vmax.f32 %v761, 0.0
        %v811 = vmax.f32 %v763, 0.0
        %v812 = vmax.f32 %v766, 0.0
        %v813 = vmax.f32 %v768, 0.0
        %v814 = vmax.f32 %v771, 0.0
        %v815 = vmax.f32 %v773, 0.0
        %v816 = vmax.f32 %v776, 0.0
        %v817 = vmax.f32 %v778, 0.0
        %v818 = vmax.f32 %v781, 0.0
        %v819 = vmax.f32 %v783, 0.0
        %v820 = vmax.f32 %v786, 0.0
        %v821 = vmax.f32 %v788, 0.0
        %v822 = vld [vmem:[%s3] sm:$0xff]
        %v823 = vld [vmem:[%s3 + $0x8] sm:$0xff]
        %v824 = vld [vmem:[%s3 + $0x10] sm:$0xff]
        %v825 = vld [vmem:[%s3 + $0x18] sm:$0xff]
        %v826 = vld [vmem:[%s3 + $0x20] sm:$0xff]
        %v827 = vld [vmem:[%s3 + $0x28] sm:$0xff]
        %v828 = vld [vmem:[%s3 + $0x30] sm:$0xff]
        %v829 = vld [vmem:[%s3 + $0x38] sm:$0xff]
        %v830 = vld [vmem:[%s3 + $0x40] sm:$0xff]
        %v831 = vld [vmem:[%s3 + $0x48] sm:$0xff]
        %v832 = vld [vmem:[%s3 + $0x50] sm:$0xff]
        %v833 = vld [vmem:[%s3 + $0x58] sm:$0xff]
        %v834 = vld [vmem:[%s3 + $0x60] sm:$0xff]
        %v835 = vld [vmem:[%s3 + $0x68] sm:$0xff]
        %v836 = vld [vmem:[%s3 + $0x70] sm:$0xff]
        %v837 = vld [vmem:[%s3 + $0x78] sm:$0xff]
        %v838 = vld [vmem:[%s3 + $0x80] sm:$0xff]
        %v839 = vld [vmem:[%s3 + $0x88] sm:$0xff]
        %v840 = vld [vmem:[%s3 + $0x90] sm:$0xff]
        %v841 = vld [vmem:[%s3 + $0x98] sm:$0xff]
        %v842 = vld [vmem:[%s3 + $0xa0] sm:$0xff]
        %v843 = vld [vmem:[%s3 + $0xa8] sm:$0xff]
        %v844 = vld [vmem:[%s3 + $0xb0] sm:$0xff]
        %v845 = vld [vmem:[%s3 + $0xb8] sm:$0xff]
        %v846 = vld [vmem:[%s3 + $0xc0] sm:$0xff]
        %v847 = vld [vmem:[%s3 + $0xc8] sm:$0xff]
        %v848 = vld [vmem:[%s3 + $0xd0] sm:$0xff]
        %v849 = vld [vmem:[%s3 + $0xd8] sm:$0xff]
        %v850 = vld [vmem:[%s3 + $0xe0] sm:$0xff]
        %v851 = vld [vmem:[%s3 + $0xe8] sm:$0xff]
        %v852 = vld [vmem:[%s3 + $0xf0] sm:$0xff]
        %v853 = vld [vmem:[%s3 + $0xf8] sm:$0xff]
        %v854 = vpack.c.bf16 %v791, %v790
        %v855 = vpack.c.bf16 %v793, %v792
        %v856 = vpack.c.bf16 %v795, %v794
        %v857 = vpack.c.bf16 %v797, %v796
        %v858 = vpack.c.bf16 %v799, %v798
        %v859 = vpack.c.bf16 %v801, %v800
        %v860 = vpack.c.bf16 %v803, %v802
        %v861 = vpack.c.bf16 %v805, %v804
        %v862 = vpack.c.bf16 %v807, %v806
        %v863 = vpack.c.bf16 %v809, %v808
        %v864 = vpack.c.bf16 %v811, %v810
        %v865 = vpack.c.bf16 %v813, %v812
        %v866 = vpack.c.bf16 %v815, %v814
        %v867 = vpack.c.bf16 %v817, %v816
        %v868 = vpack.c.bf16 %v819, %v818
        %v869 = vpack.c.bf16 %v821, %v820
        %v870 = vld [vmem:[%s4] sm:$0xff]
        %v871 = vld [vmem:[%s4 + $0x8] sm:$0xff]
        %v872 = vld [vmem:[%s4 + $0x10] sm:$0xff]
        %v873 = vld [vmem:[%s4 + $0x18] sm:$0xff]
        %v874 = vld [vmem:[%s4 + $0x20] sm:$0xff]
        %v875 = vld [vmem:[%s4 + $0x28] sm:$0xff]
        %v876 = vld [vmem:[%s4 + $0x30] sm:$0xff]
        %v877 = vld [vmem:[%s4 + $0x38] sm:$0xff]
        %v878 = vld [vmem:[%s4 + $0x40] sm:$0xff]
        %v879 = vld [vmem:[%s4 + $0x48] sm:$0xff]
        %v880 = vld [vmem:[%s4 + $0x50] sm:$0xff]
        %v881 = vld [vmem:[%s4 + $0x58] sm:$0xff]
        %v882 = vld [vmem:[%s4 + $0x60] sm:$0xff]
        %v883 = vld [vmem:[%s4 + $0x68] sm:$0xff]
        %v884 = vld [vmem:[%s4 + $0x70] sm:$0xff]
        %v885 = vld [vmem:[%s4 + $0x78] sm:$0xff]
        %v886 = vld [vmem:[%s4 + $0x80] sm:$0xff]
        %v887 = vld [vmem:[%s4 + $0x88] sm:$0xff]
        %v888 = vld [vmem:[%s4 + $0x90] sm:$0xff]
        %v889 = vld [vmem:[%s4 + $0x98] sm:$0xff]
        %v890 = vld [vmem:[%s4 + $0xa0] sm:$0xff]
        %v891 = vld [vmem:[%s4 + $0xa8] sm:$0xff]
        %v892 = vld [vmem:[%s4 + $0xb0] sm:$0xff]
        %v893 = vld [vmem:[%s4 + $0xb8] sm:$0xff]
        %v894 = vld [vmem:[%s4 + $0xc0] sm:$0xff]
        %v895 = vld [vmem:[%s4 + $0xc8] sm:$0xff]
        %v896 = vld [vmem:[%s4 + $0xd0] sm:$0xff]
        %v897 = vld [vmem:[%s4 + $0xd8] sm:$0xff]
        %v898 = vld [vmem:[%s4 + $0xe0] sm:$0xff]
        %v899 = vld [vmem:[%s4 + $0xe8] sm:$0xff]
        %v900 = vld [vmem:[%s4 + $0xf0] sm:$0xff]
        %v901 = vld [vmem:[%s4 + $0xf8] sm:$0xff]
        %903 = vset.pattern.permute.xlu0 0
        %904 = vperm.xlu0 %903, %v870
        %v905 = vpop.permute.xlu0 %904
        %908 = vset.pattern.permute.xlu0 0
        %909 = vperm.xlu0 %908, %v871
        %v910 = vpop.permute.xlu0 %909
        %913 = vset.pattern.permute.xlu0 0
        %914 = vperm.xlu0 %913, %v872
        %v915 = vpop.permute.xlu0 %914
        %918 = vset.pattern.permute.xlu0 0
        %919 = vperm.xlu0 %918, %v873
        %v920 = vpop.permute.xlu0 %919
        %923 = vset.pattern.permute.xlu0 0
        %924 = vperm.xlu0 %923, %v874
        %v925 = vpop.permute.xlu0 %924
        %928 = vset.pattern.permute.xlu0 0
        %929 = vperm.xlu0 %928, %v875
        %v930 = vpop.permute.xlu0 %929
        %933 = vset.pattern.permute.xlu0 0
        %934 = vperm.xlu0 %933, %v876
        %v935 = vpop.permute.xlu0 %934
        %938 = vset.pattern.permute.xlu0 0
        %939 = vperm.xlu0 %938, %v877
        %v940 = vpop.permute.xlu0 %939
        %943 = vset.pattern.permute.xlu0 0
        %944 = vperm.xlu0 %943, %v878
        %v945 = vpop.permute.xlu0 %944
        %948 = vset.pattern.permute.xlu0 0
        %949 = vperm.xlu0 %948, %v879
        %v950 = vpop.permute.xlu0 %949
        %953 = vset.pattern.permute.xlu0 0
        %954 = vperm.xlu0 %953, %v880
        %v955 = vpop.permute.xlu0 %954
        %958 = vset.pattern.permute.xlu0 0
        %959 = vperm.xlu0 %958, %v881
        %v960 = vpop.permute.xlu0 %959
        %963 = vset.pattern.permute.xlu0 0
        %964 = vperm.xlu0 %963, %v882
        %v965 = vpop.permute.xlu0 %964
        %968 = vset.pattern.permute.xlu0 0
        %969 = vperm.xlu0 %968, %v883
        %v970 = vpop.permute.xlu0 %969
        %973 = vset.pattern.permute.xlu0 0
        %974 = vperm.xlu0 %973, %v884
        %v975 = vpop.permute.xlu0 %974
        %978 = vset.pattern.permute.xlu0 0
        %979 = vperm.xlu0 %978, %v885
        %v980 = vpop.permute.xlu0 %979
        %983 = vset.pattern.permute.xlu0 0
        %984 = vperm.xlu0 %983, %v886
        %v985 = vpop.permute.xlu0 %984
        %988 = vset.pattern.permute.xlu0 0
        %989 = vperm.xlu0 %988, %v887
        %v990 = vpop.permute.xlu0 %989
        %993 = vset.pattern.permute.xlu0 0
        %994 = vperm.xlu0 %993, %v888
        %v995 = vpop.permute.xlu0 %994
        %998 = vset.pattern.permute.xlu0 0
        %999 = vperm.xlu0 %998, %v889
        %v1000 = vpop.permute.xlu0 %999
        %1003 = vset.pattern.permute.xlu0 0
        %1004 = vperm.xlu0 %1003, %v890
        %v1005 = vpop.permute.xlu0 %1004
        %1008 = vset.pattern.permute.xlu0 0
        %1009 = vperm.xlu0 %1008, %v891
        %v1010 = vpop.permute.xlu0 %1009
        %1013 = vset.pattern.permute.xlu0 0
        %1014 = vperm.xlu0 %1013, %v892
        %v1015 = vpop.permute.xlu0 %1014
        %1018 = vset.pattern.permute.xlu0 0
        %1019 = vperm.xlu0 %1018, %v893
        %v1020 = vpop.permute.xlu0 %1019
        %1023 = vset.pattern.permute.xlu0 0
        %1024 = vperm.xlu0 %1023, %v894
        %v1025 = vpop.permute.xlu0 %1024
        %1028 = vset.pattern.permute.xlu0 0
        %1029 = vperm.xlu0 %1028, %v895
        %v1030 = vpop.permute.xlu0 %1029
        %1033 = vset.pattern.permute.xlu0 0
        %1034 = vperm.xlu0 %1033, %v896
        %v1035 = vpop.permute.xlu0 %1034
        %1038 = vset.pattern.permute.xlu0 0
        %1039 = vperm.xlu0 %1038, %v897
        %v1040 = vpop.permute.xlu0 %1039
        %1043 = vset.pattern.permute.xlu0 0
        %1044 = vperm.xlu0 %1043, %v898
        %v1045 = vpop.permute.xlu0 %1044
        %1048 = vset.pattern.permute.xlu0 0
        %1049 = vperm.xlu0 %1048, %v899
        %v1050 = vpop.permute.xlu0 %1049
        %1053 = vset.pattern.permute.xlu0 0
        %1054 = vperm.xlu0 %1053, %v900
        %v1055 = vpop.permute.xlu0 %1054
        %1058 = vset.pattern.permute.xlu0 0
        %1059 = vperm.xlu0 %1058, %v901
        %v1060 = vpop.permute.xlu0 %1059
        %v1094 = vunpack.c.l.b16 %v822
        %v1095 = vunpack.c.h.b16 %v822
        %v1096 = vunpack.c.l.b16 %v823
        %v1097 = vunpack.c.h.b16 %v823
        %v1098 = vunpack.c.l.b16 %v824
        %v1099 = vunpack.c.h.b16 %v824
        %v1100 = vunpack.c.l.b16 %v825
        %v1101 = vunpack.c.h.b16 %v825
        %v1102 = vunpack.c.l.b16 %v826
        %v1103 = vunpack.c.h.b16 %v826
        %v1104 = vunpack.c.l.b16 %v827
        %v1105 = vunpack.c.h.b16 %v827
        %v1106 = vunpack.c.l.b16 %v828
        %v1107 = vunpack.c.h.b16 %v828
        %v1108 = vunpack.c.l.b16 %v829
        %v1109 = vunpack.c.h.b16 %v829
        %v1110 = vunpack.c.l.b16 %v830
        %v1111 = vunpack.c.h.b16 %v830
        %v1112 = vunpack.c.l.b16 %v831
        %v1113 = vunpack.c.h.b16 %v831
        %v1114 = vunpack.c.l.b16 %v832
        %v1115 = vunpack.c.h.b16 %v832
        %v1116 = vunpack.c.l.b16 %v833
        %v1117 = vunpack.c.h.b16 %v833
        %v1118 = vunpack.c.l.b16 %v834
        %v1119 = vunpack.c.h.b16 %v834
        %v1120 = vunpack.c.l.b16 %v835
        %v1121 = vunpack.c.h.b16 %v835
        %v1122 = vunpack.c.l.b16 %v836
        %v1123 = vunpack.c.h.b16 %v836
        %v1124 = vunpack.c.l.b16 %v837
        %v1125 = vunpack.c.h.b16 %v837
        %v1126 = vunpack.c.l.b16 %v838
        %v1127 = vunpack.c.h.b16 %v838
        %v1128 = vunpack.c.l.b16 %v839
        %v1129 = vunpack.c.h.b16 %v839
        %v1130 = vunpack.c.l.b16 %v840
        %v1131 = vunpack.c.h.b16 %v840
        %v1132 = vunpack.c.l.b16 %v841
        %v1133 = vunpack.c.h.b16 %v841
        %v1134 = vunpack.c.l.b16 %v842
        %v1135 = vunpack.c.h.b16 %v842
        %v1136 = vunpack.c.l.b16 %v843
        %v1137 = vunpack.c.h.b16 %v843
        %v1138 = vunpack.c.l.b16 %v844
        %v1139 = vunpack.c.h.b16 %v844
        %v1140 = vunpack.c.l.b16 %v845
        %v1141 = vunpack.c.h.b16 %v845
        %v1142 = vunpack.c.l.b16 %v846
        %v1143 = vunpack.c.h.b16 %v846
        %v1144 = vunpack.c.l.b16 %v847
        %v1145 = vunpack.c.h.b16 %v847
        %v1146 = vunpack.c.l.b16 %v848
        %v1147 = vunpack.c.h.b16 %v848
        %v1148 = vunpack.c.l.b16 %v849
        %v1149 = vunpack.c.h.b16 %v849
        %v1150 = vunpack.c.l.b16 %v850
        %v1151 = vunpack.c.h.b16 %v850
        %v1152 = vunpack.c.l.b16 %v851
        %v1153 = vunpack.c.h.b16 %v851
        %v1154 = vunpack.c.l.b16 %v852
        %v1155 = vunpack.c.h.b16 %v852
        %v1156 = vunpack.c.l.b16 %v853
        %v1157 = vunpack.c.h.b16 %v853
        %v1158 = vpack.c.b16 %v1096, %v1094
        %v1159 = vpack.c.b16 %v1097, %v1095
        %v1160 = vpack.c.b16 %v1100, %v1098
        %v1161 = vpack.c.b16 %v1101, %v1099
        %v1162 = vpack.c.b16 %v1104, %v1102
        %v1163 = vpack.c.b16 %v1105, %v1103
        %v1164 = vpack.c.b16 %v1108, %v1106
        %v1165 = vpack.c.b16 %v1109, %v1107
        %v1166 = vpack.c.b16 %v1112, %v1110
        %v1167 = vpack.c.b16 %v1113, %v1111
        %v1168 = vpack.c.b16 %v1116, %v1114
        %v1169 = vpack.c.b16 %v1117, %v1115
        %v1170 = vpack.c.b16 %v1120, %v1118
        %v1171 = vpack.c.b16 %v1121, %v1119
        %v1172 = vpack.c.b16 %v1124, %v1122
        %v1173 = vpack.c.b16 %v1125, %v1123
        %v1174 = vpack.c.b16 %v1128, %v1126
        %v1175 = vpack.c.b16 %v1129, %v1127
        %v1176 = vpack.c.b16 %v1132, %v1130
        %v1177 = vpack.c.b16 %v1133, %v1131
        %v1178 = vpack.c.b16 %v1136, %v1134
        %v1179 = vpack.c.b16 %v1137, %v1135
        %v1180 = vpack.c.b16 %v1140, %v1138
        %v1181 = vpack.c.b16 %v1141, %v1139
        %v1182 = vpack.c.b16 %v1144, %v1142
        %v1183 = vpack.c.b16 %v1145, %v1143
        %v1184 = vpack.c.b16 %v1148, %v1146
        %v1185 = vpack.c.b16 %v1149, %v1147
        %v1186 = vpack.c.b16 %v1152, %v1150
        %v1187 = vpack.c.b16 %v1153, %v1151
        %v1188 = vpack.c.b16 %v1156, %v1154
        %v1189 = vpack.c.b16 %v1157, %v1155
        %1222 = vmatpush.bf16.msra.mxu0 %v861
        %1223 = vmatpush.bf16.msra.mxu0 %v860
        %1224 = vmatpush.bf16.msra.mxu0 %v859
        %1225 = vmatpush.bf16.msra.mxu0 %v858
        %1226 = vmatpush.bf16.msra.mxu0 %v857
        %1227 = vmatpush.bf16.msra.mxu0 %v856
        %1228 = vmatpush.bf16.msra.mxu0 %v855
        %1229 = vmatpush.bf16.msra.mxu0 %v854
        %1230 = vmatmul.bf16.gmra.mxu0 %v1158
        %v1231 = vpop.f32.mrf.mxu0
        %v1232 = vadd.f32 %v905, %v1231
        %v1233 = vpop.f32.mrf.mxu0
        %v1234 = vadd.f32 %v910, %v1233
        %1235 = vmatmul.bf16.gmra.mxu0 %v1160
        %v1236 = vpop.f32.mrf.mxu0
        %v1237 = vadd.f32 %v915, %v1236
        %v1238 = vpop.f32.mrf.mxu0
        %v1239 = vadd.f32 %v920, %v1238
        %1240 = vmatmul.bf16.gmra.mxu0 %v1162
        %v1241 = vpop.f32.mrf.mxu0
        %v1242 = vadd.f32 %v925, %v1241
        %v1243 = vpop.f32.mrf.mxu0
        %v1244 = vadd.f32 %v930, %v1243
        %1245 = vmatmul.bf16.gmra.mxu0 %v1164
        %v1246 = vpop.f32.mrf.mxu0
        %v1247 = vadd.f32 %v935, %v1246
        %v1248 = vpop.f32.mrf.mxu0
        %v1249 = vadd.f32 %v940, %v1248
        %1250 = vmatmul.bf16.gmra.mxu0 %v1166
        %v1251 = vpop.f32.mrf.mxu0
        %v1252 = vadd.f32 %v945, %v1251
        %v1253 = vpop.f32.mrf.mxu0
        %v1254 = vadd.f32 %v950, %v1253
        %1255 = vmatmul.bf16.gmra.mxu0 %v1168
        %v1256 = vpop.f32.mrf.mxu0
        %v1257 = vadd.f32 %v955, %v1256
        %v1258 = vpop.f32.mrf.mxu0
        %v1259 = vadd.f32 %v960, %v1258
        %1260 = vmatmul.bf16.gmra.mxu0 %v1170
        %v1261 = vpop.f32.mrf.mxu0
        %v1262 = vadd.f32 %v965, %v1261
        %v1263 = vpop.f32.mrf.mxu0
        %v1264 = vadd.f32 %v970, %v1263
        %1265 = vmatmul.bf16.gmra.mxu0 %v1172
        %v1266 = vpop.f32.mrf.mxu0
        %v1267 = vadd.f32 %v975, %v1266
        %v1268 = vpop.f32.mrf.mxu0
        %v1269 = vadd.f32 %v980, %v1268
        %1270 = vmatmul.bf16.gmra.mxu0 %v1174
        %v1271 = vpop.f32.mrf.mxu0
        %v1272 = vadd.f32 %v985, %v1271
        %v1273 = vpop.f32.mrf.mxu0
        %v1274 = vadd.f32 %v990, %v1273
        %1275 = vmatmul.bf16.gmra.mxu0 %v1176
        %v1276 = vpop.f32.mrf.mxu0
        %v1277 = vadd.f32 %v995, %v1276
        %v1278 = vpop.f32.mrf.mxu0
        %v1279 = vadd.f32 %v1000, %v1278
        %1280 = vmatmul.bf16.gmra.mxu0 %v1178
        %v1281 = vpop.f32.mrf.mxu0
        %v1282 = vadd.f32 %v1005, %v1281
        %v1283 = vpop.f32.mrf.mxu0
        %v1284 = vadd.f32 %v1010, %v1283
        %1285 = vmatmul.bf16.gmra.mxu0 %v1180
        %v1286 = vpop.f32.mrf.mxu0
        %v1287 = vadd.f32 %v1015, %v1286
        %v1288 = vpop.f32.mrf.mxu0
        %v1289 = vadd.f32 %v1020, %v1288
        %1290 = vmatmul.bf16.gmra.mxu0 %v1182
        %v1291 = vpop.f32.mrf.mxu0
        %v1292 = vadd.f32 %v1025, %v1291
        %v1293 = vpop.f32.mrf.mxu0
        %v1294 = vadd.f32 %v1030, %v1293
        %1295 = vmatmul.bf16.gmra.mxu0 %v1184
        %v1296 = vpop.f32.mrf.mxu0
        %v1297 = vadd.f32 %v1035, %v1296
        %v1298 = vpop.f32.mrf.mxu0
        %v1299 = vadd.f32 %v1040, %v1298
        %1300 = vmatmul.bf16.gmra.mxu0 %v1186
        %v1301 = vpop.f32.mrf.mxu0
        %v1302 = vadd.f32 %v1045, %v1301
        %v1303 = vpop.f32.mrf.mxu0
        %v1304 = vadd.f32 %v1050, %v1303
        %1305 = vmatmul.bf16.gmra.mxu0 %v1188
        %v1306 = vpop.f32.mrf.mxu0
        %v1307 = vadd.f32 %v1055, %v1306
        %v1308 = vpop.f32.mrf.mxu0
        %v1309 = vadd.f32 %v1060, %v1308
        %1310 = vdwg.mxu0
        %1311 = vmatpush.bf16.msra.mxu0 %v869
        %1312 = vmatpush.bf16.msra.mxu0 %v868
        %1313 = vmatpush.bf16.msra.mxu0 %v867
        %1314 = vmatpush.bf16.msra.mxu0 %v866
        %1315 = vmatpush.bf16.msra.mxu0 %v865
        %1316 = vmatpush.bf16.msra.mxu0 %v864
        %1317 = vmatpush.bf16.msra.mxu0 %v863
        %1318 = vmatpush.bf16.msra.mxu0 %v862
        %1319 = vmatmul.bf16.gmra.mxu0 %v1159
        %v1320 = vpop.f32.mrf.mxu0
        %v1321 = vadd.f32 %v1232, %v1320
        %v1322 = vpop.f32.mrf.mxu0
        %v1323 = vadd.f32 %v1234, %v1322
        %1324 = vmatmul.bf16.gmra.mxu0 %v1161
        %v1325 = vpop.f32.mrf.mxu0
        %v1326 = vadd.f32 %v1237, %v1325
        %v1327 = vpop.f32.mrf.mxu0
        %v1328 = vadd.f32 %v1239, %v1327
        %1329 = vmatmul.bf16.gmra.mxu0 %v1163
        %v1330 = vpop.f32.mrf.mxu0
        %v1331 = vadd.f32 %v1242, %v1330
        %v1332 = vpop.f32.mrf.mxu0
        %v1333 = vadd.f32 %v1244, %v1332
        %1334 = vmatmul.bf16.gmra.mxu0 %v1165
        %v1335 = vpop.f32.mrf.mxu0
        %v1336 = vadd.f32 %v1247, %v1335
        %v1337 = vpop.f32.mrf.mxu0
        %v1338 = vadd.f32 %v1249, %v1337
        %1339 = vmatmul.bf16.gmra.mxu0 %v1167
        %v1340 = vpop.f32.mrf.mxu0
        %v1341 = vadd.f32 %v1252, %v1340
        %v1342 = vpop.f32.mrf.mxu0
        %v1343 = vadd.f32 %v1254, %v1342
        %1344 = vmatmul.bf16.gmra.mxu0 %v1169
        %v1345 = vpop.f32.mrf.mxu0
        %v1346 = vadd.f32 %v1257, %v1345
        %v1347 = vpop.f32.mrf.mxu0
        %v1348 = vadd.f32 %v1259, %v1347
        %1349 = vmatmul.bf16.gmra.mxu0 %v1171
        %v1350 = vpop.f32.mrf.mxu0
        %v1351 = vadd.f32 %v1262, %v1350
        %v1352 = vpop.f32.mrf.mxu0
        %v1353 = vadd.f32 %v1264, %v1352
        %1354 = vmatmul.bf16.gmra.mxu0 %v1173
        %v1355 = vpop.f32.mrf.mxu0
        %v1356 = vadd.f32 %v1267, %v1355
        %v1357 = vpop.f32.mrf.mxu0
        %v1358 = vadd.f32 %v1269, %v1357
        %1359 = vmatmul.bf16.gmra.mxu0 %v1175
        %v1360 = vpop.f32.mrf.mxu0
        %v1361 = vadd.f32 %v1272, %v1360
        %v1362 = vpop.f32.mrf.mxu0
        %v1363 = vadd.f32 %v1274, %v1362
        %1364 = vmatmul.bf16.gmra.mxu0 %v1177
        %v1365 = vpop.f32.mrf.mxu0
        %v1366 = vadd.f32 %v1277, %v1365
        %v1367 = vpop.f32.mrf.mxu0
        %v1368 = vadd.f32 %v1279, %v1367
        %1369 = vmatmul.bf16.gmra.mxu0 %v1179
        %v1370 = vpop.f32.mrf.mxu0
        %v1371 = vadd.f32 %v1282, %v1370
        %v1372 = vpop.f32.mrf.mxu0
        %v1373 = vadd.f32 %v1284, %v1372
        %1374 = vmatmul.bf16.gmra.mxu0 %v1181
        %v1375 = vpop.f32.mrf.mxu0
        %v1376 = vadd.f32 %v1287, %v1375
        %v1377 = vpop.f32.mrf.mxu0
        %v1378 = vadd.f32 %v1289, %v1377
        %1379 = vmatmul.bf16.gmra.mxu0 %v1183
        %v1380 = vpop.f32.mrf.mxu0
        %v1381 = vadd.f32 %v1292, %v1380
        %v1382 = vpop.f32.mrf.mxu0
        %v1383 = vadd.f32 %v1294, %v1382
        %1384 = vmatmul.bf16.gmra.mxu0 %v1185
        %v1385 = vpop.f32.mrf.mxu0
        %v1386 = vadd.f32 %v1297, %v1385
        %v1387 = vpop.f32.mrf.mxu0
        %v1388 = vadd.f32 %v1299, %v1387
        %1389 = vmatmul.bf16.gmra.mxu0 %v1187
        %v1390 = vpop.f32.mrf.mxu0
        %v1391 = vadd.f32 %v1302, %v1390
        %v1392 = vpop.f32.mrf.mxu0
        %v1393 = vadd.f32 %v1304, %v1392
        %1394 = vmatmul.bf16.gmra.mxu0 %v1189
        %v1395 = vpop.f32.mrf.mxu0
        %v1396 = vadd.f32 %v1307, %v1395
        %v1397 = vpop.f32.mrf.mxu0
        %v1398 = vadd.f32 %v1309, %v1397
        %1399 = vdwg.mxu0
        %v1400 = vmax.f32 %v1321, 0.0
        %v1401 = vmax.f32 %v1323, 0.0
        %v1402 = vmax.f32 %v1326, 0.0
        %v1403 = vmax.f32 %v1328, 0.0
        %v1404 = vmax.f32 %v1331, 0.0
        %v1405 = vmax.f32 %v1333, 0.0
        %v1406 = vmax.f32 %v1336, 0.0
        %v1407 = vmax.f32 %v1338, 0.0
        %v1408 = vmax.f32 %v1341, 0.0
        %v1409 = vmax.f32 %v1343, 0.0
        %v1410 = vmax.f32 %v1346, 0.0
        %v1411 = vmax.f32 %v1348, 0.0
        %v1412 = vmax.f32 %v1351, 0.0
        %v1413 = vmax.f32 %v1353, 0.0
        %v1414 = vmax.f32 %v1356, 0.0
        %v1415 = vmax.f32 %v1358, 0.0
        %v1416 = vmax.f32 %v1361, 0.0
        %v1417 = vmax.f32 %v1363, 0.0
        %v1418 = vmax.f32 %v1366, 0.0
        %v1419 = vmax.f32 %v1368, 0.0
        %v1420 = vmax.f32 %v1371, 0.0
        %v1421 = vmax.f32 %v1373, 0.0
        %v1422 = vmax.f32 %v1376, 0.0
        %v1423 = vmax.f32 %v1378, 0.0
        %v1424 = vmax.f32 %v1381, 0.0
        %v1425 = vmax.f32 %v1383, 0.0
        %v1426 = vmax.f32 %v1386, 0.0
        %v1427 = vmax.f32 %v1388, 0.0
        %v1428 = vmax.f32 %v1391, 0.0
        %v1429 = vmax.f32 %v1393, 0.0
        %v1430 = vmax.f32 %v1396, 0.0
        %v1431 = vmax.f32 %v1398, 0.0
        %v1432 = vld [vmem:[%s5] sm:$0x3]
        %v1433 = vpack.c.bf16 %v1401, %v1400
        %v1434 = vpack.c.bf16 %v1403, %v1402
        %v1435 = vpack.c.bf16 %v1405, %v1404
        %v1436 = vpack.c.bf16 %v1407, %v1406
        %v1437 = vpack.c.bf16 %v1409, %v1408
        %v1438 = vpack.c.bf16 %v1411, %v1410
        %v1439 = vpack.c.bf16 %v1413, %v1412
        %v1440 = vpack.c.bf16 %v1415, %v1414
        %v1441 = vpack.c.bf16 %v1417, %v1416
        %v1442 = vpack.c.bf16 %v1419, %v1418
        %v1443 = vpack.c.bf16 %v1421, %v1420
        %v1444 = vpack.c.bf16 %v1423, %v1422
        %v1445 = vpack.c.bf16 %v1425, %v1424
        %v1446 = vpack.c.bf16 %v1427, %v1426
        %v1447 = vpack.c.bf16 %v1429, %v1428
        %v1448 = vpack.c.bf16 %v1431, %v1430
        %v1449 = vld [vmem:[#allocation2] sm:$0x1]
        %1451 = vset.pattern.permute.xlu0 0
        %1452 = vperm.xlu0 %1451, %v1449
        %v1453 = vpop.permute.xlu0 %1452
        %v1455 = vperm.slane %v1453, 0
        %1457 = vst [vmem:[#allocation1] ss:$9 sm:$0xff] %v1432
        %v1458 = vld [vmem:[#allocation1] sm:$0xff]
        %v1459 = vld [vmem:[#allocation1 + $0x9] sm:$0xff]
        %1462 = vmatpush.bf16.msra.mxu0 %v1440
        %1463 = vmatpush.bf16.msra.mxu0 %v1439
        %1464 = vmatpush.bf16.msra.mxu0 %v1438
        %1465 = vmatpush.bf16.msra.mxu0 %v1437
        %1466 = vmatpush.bf16.msra.mxu0 %v1436
        %1467 = vmatpush.bf16.msra.mxu0 %v1435
        %1468 = vmatpush.bf16.msra.mxu0 %v1434
        %1469 = vmatpush.bf16.msra.mxu0 %v1433
        %1470 = vmatmul.bf16.gmra.mxu0 %v1458
        %v1471 = vpop.f32.mrf.mxu0
        %v1472 = vadd.f32 %v1455, %v1471
        %v1473 = vpop.f32.mrf.mxu0
        %1474 = vdwg.mxu0
        %1475 = vmatpush.bf16.msra.mxu0 %v1448
        %1476 = vmatpush.bf16.msra.mxu0 %v1447
        %1477 = vmatpush.bf16.msra.mxu0 %v1446
        %1478 = vmatpush.bf16.msra.mxu0 %v1445
        %1479 = vmatpush.bf16.msra.mxu0 %v1444
        %1480 = vmatpush.bf16.msra.mxu0 %v1443
        %1481 = vmatpush.bf16.msra.mxu0 %v1442
        %1482 = vmatpush.bf16.msra.mxu0 %v1441
        %1483 = vmatmul.bf16.gmra.mxu0 %v1459
        %v1484 = vpop.f32.mrf.mxu0
        %v1485 = vadd.f32 %v1472, %v1484
        %v1486 = vpop.f32.mrf.mxu0
        %1487 = vdwg.mxu0
        %1488 = vst [vmem:[%s328] sm:$0x1] %v1485
        %s1489 = sand.u32 %s183, 1
        %s1490 = scalar_lea.sflag [#allocation5], %s1489
        %s1491 = sand.u32 %s183, 1
        %s1492 = scalar_lea.vmem [#allocation4], %s1491
        // Predicated region
        $region90: #{tpu_custom_call.1} parent=84 // pred_check
          %p1493 = pneg %p193
        $region91: #{tpu_custom_call.1} parent=84 // pred_check_branch
          %1495 = sbr.rel (%p1493) target = $region93
        $region92: #{tpu_custom_call.1} parent=84 // pred_region
          %1497 = vsyncadd %s1490, 0
          %s1498 = scalar_lea.hbm %s7, %s23
          %s1500 = sshll.u32 %s1492, 4
          %s1501 = int_to_ptr.vmem [resolvable:$true] %s1500
          %s1502 = sshll.u32 %s1498, 4
          %s1503 = int_to_ptr.hbm [resolvable:$true] %s1502
          %1505 = dma.vmem_to_hbm [thread:$0]  %s1501, 16, %s1503, %s1490
        $region93: #{tpu_custom_call.1} parent=84 // pred_fallthru
          _
      $region85: #{tpu_custom_call.1} parent=5 // pred_fallthru
        _
      %p1506 = scmp.le.s32.totalorder 2, %s18
      // Predicated region
      $region94: #{tpu_custom_call.1} parent=5 // pred_check
        %p1507 = pneg %p1506
      $region95: #{tpu_custom_call.1} parent=5 // pred_check_branch
        %1509 = sbr.rel (%p1507) target = $region97
      $region96: #{tpu_custom_call.1} parent=5 // pred_region
        %s1510 = ssub.s32 %s18, 2
        // Predicated region
        $region98: #{tpu_custom_call.1} parent=96 // pred_check
          %p1511 = pneg %p199
        $region99: #{tpu_custom_call.1} parent=96 // pred_check_branch
          %1513 = sbr.rel (%p1511) target = $region101
        $region100: #{tpu_custom_call.1} parent=96 // pred_region
          %s1514 = sand.u32 %s184, 1
          %s1515 = scalar_lea.sflag [#allocation5], %s1514
          %s1516 = sand.u32 %s184, 1
          %s1517 = scalar_lea.vmem [#allocation4], %s1516
          %1519 = dma.done %s1515, 16
        $region101: #{tpu_custom_call.1} parent=96 // pred_fallthru
          _
      $region97: #{tpu_custom_call.1} parent=5 // pred_fallthru
        _
    $region6: #{tpu_custom_call.1} parent=1 // loop_footer
      %s22 = sadd.s32 1, %s18
    $region7: #{tpu_custom_call.1} parent=1 // loop_footer_branch
      %17 = sbr.rel target = $region3
    $region8: #{tpu_custom_call.1} parent=1 // loop_exit
      _
    %1520 = vsyncpa [#allocation5], 1
    %s1521 = scalar_lea.sflag [#allocation5], 1
    %1522 = vsyncpa %s1521, 1

</llo_original>
